<compile_context>
chip_gen: v7x
topology: tpu7x:2x2x1
jax: 0.10.0
libtpu: 0.0.40
codegen_flags: <defaults>
</compile_context>

<pallas_src>
import functools

import jax
import jax.numpy as jnp
from jax import lax
from jax.experimental import pallas as pl
from jax.experimental.pallas import tpu as pltpu


def attention_kernel(x_ref, wqkv_ref, bqkv_ref, o_ref, *, d_k, bt, s):
    # x_ref block: (Bt, S, C)
    x = x_ref[...]                                    # (Bt, S, C) f32
    c = x.shape[-1]

    # ---- Fused QKV projection: one big MXU matmul over Bt*S rows -----------
    x2 = x.reshape(bt * s, c)                         # merge leading dims (no lane change)
    w = wqkv_ref[...]                                 # (C, 3*Dk)
    b = bqkv_ref[...]                                 # (1, 3*Dk)
    qkv = jnp.dot(x2, w, preferred_element_type=jnp.float32) + b   # (Bt*S, 3*Dk)
    qkv = qkv.reshape(bt, s, 3 * d_k)

    # Fold the 1/sqrt(d_k) softmax scale into Q (cheaper than scaling S^2 logits).
    scale = jnp.float32(1.0 / (d_k ** 0.5))
    q = qkv[:, :, 0:d_k] * scale                      # (Bt, S, Dk)
    k = qkv[:, :, d_k:2 * d_k]                        # (Bt, S, Dk)
    v = qkv[:, :, 2 * d_k:3 * d_k]                    # (Bt, S, Dk)

    # ---- Attention logits: batched NT dot (no explicit transpose of K) -----
    logits = lax.dot_general(
        q, k,
        dimension_numbers=(((2,), (2,)), ((0,), (0,))),
        preferred_element_type=jnp.float32)           # (Bt, S, S)

    # ---- Numerically-stable softmax (f32) ----------------------------------
    m = jnp.max(logits, axis=-1, keepdims=True)
    e = jnp.exp(logits - m)
    denom = jnp.sum(e, axis=-1, keepdims=True)
    attn = e * pl.reciprocal(denom, approx=True)      # EUP vrcp; denom >= 1

    # ---- attention_output = attn @ V ---------------------------------------
    out = lax.dot_general(
        attn, v,
        dimension_numbers=(((2,), (1,)), ((0,), (0,))),
        preferred_element_type=jnp.float32)           # (Bt, S, Dk)
    o_ref[...] = out.astype(o_ref.dtype)


def attention_forward(x, wq, bq, wk, bk, wv, bv, *, block_b=4):
    """x: [B, S, C]; wq/wk/wv: [C, Dk]; bq/bk/bv: [1, Dk] -> [B, S, Dk]."""
    B, S, C = x.shape
    Dk = wq.shape[1]

    # Pack projection params once (in practice they'd be stored packed).
    w_qkv = jnp.concatenate([wq, wk, wv], axis=1)     # (C, 3*Dk)
    b_qkv = jnp.concatenate([bq, bk, bv], axis=1)     # (1, 3*Dk)

    # Batch tile size: amortize per-step overhead, but keep >=2 grid steps
    # when possible so both TensorCores (v7x) get work.
    bt = block_b
    if B % bt != 0:
        bt = 1
    grid_b = B // bt

    kernel = functools.partial(attention_kernel, d_k=Dk, bt=bt, s=S)

    return pl.pallas_call(
        kernel,
        out_shape=jax.ShapeDtypeStruct((B, S, Dk), x.dtype),
        grid_spec=pltpu.PrefetchScalarGridSpec(
            num_scalar_prefetch=0,
            grid=(grid_b,),
            in_specs=[
                pl.BlockSpec((bt, S, C), lambda b: (b, 0, 0)),     # x
                pl.BlockSpec((C, 3 * Dk), lambda b: (0, 0)),       # packed W_qkv
                pl.BlockSpec((1, 3 * Dk), lambda b: (0, 0)),       # packed b_qkv
            ],
            out_specs=pl.BlockSpec((bt, S, Dk), lambda b: (b, 0, 0)),
        ),
        compiler_params=pltpu.CompilerParams(
            dimension_semantics=("parallel",),
        ),
    )(x, w_qkv, b_qkv)


def attention_ref(x, wq, bq, wk, bk, wv, bv):
    """Pure-JAX reference matching the PyTorch module semantics."""
    d_k = wq.shape[1]
    q = x @ wq + bq
    k = x @ wk + bk
    v = x @ wv + bv
    logits = jnp.einsum("bsd,btd->bst", q, k) / (d_k ** 0.5)
    w = jax.nn.softmax(logits, axis=-1)
    return jnp.einsum("bst,btd->bsd", w, v)


if __name__ == "__main__":
    # Small shapes consistent with the module: nchannels=32, d_k=nchannels.
    B, S, C = 8, 8, 32
    Dk = C  # d_k defaults to nchannels

    key = jax.random.PRNGKey(0)
    kx, kq, kbq, kk, kbk, kv, kbv = jax.random.split(key, 7)

    x = jax.random.normal(kx, (B, S, C), dtype=jnp.float32)

    # Deterministic parameter init (shapes from nn.Linear(nchannels, d_k)),
    # stored pre-transposed as [C, Dk]; biases as [1, Dk].
    bound = 1.0 / (C ** 0.5)
    wq = jax.random.uniform(kq, (C, Dk), jnp.float32, -bound, bound)
    bq = jax.random.uniform(kbq, (1, Dk), jnp.float32, -bound, bound)
    wk = jax.random.uniform(kk, (C, Dk), jnp.float32, -bound, bound)
    bk = jax.random.uniform(kbk, (1, Dk), jnp.float32, -bound, bound)
    wv = jax.random.uniform(kv, (C, Dk), jnp.float32, -bound, bound)
    bv = jax.random.uniform(kbv, (1, Dk), jnp.float32, -bound, bound)

    out = attention_forward(x, wq, bq, wk, bk, wv, bv, block_b=4)
    out = jax.block_until_ready(out)

    ref = attention_ref(x, wq, bq, wk, bk, wv, bv)
    assert out.shape == (B, S, Dk)
    # Tolerance slightly relaxed for the EUP approximate reciprocal in softmax.
    assert jnp.allclose(out, ref, atol=2e-3, rtol=2e-3), "mismatch vs reference"

    print("KERNEL_OK")
</pallas_src>

<mosaic_0001>
module attributes {stable_mosaic.version = 11 : i64} {
  func.func @attention_kernel(%arg0: i32, %arg1: memref<4x8x32xf32, #tpu.memory_space<vmem>>, %arg2: memref<32x96xf32, #tpu.memory_space<vmem>>, %arg3: memref<1x96xf32, #tpu.memory_space<vmem>>, %arg4: memref<4x8x32xf32, #tpu.memory_space<vmem>>) attributes {dimension_semantics = [#tpu.dimension_semantics<parallel>], iteration_bounds = array<i64: 2>, scalar_prefetch = 0 : i64, scratch_operands = 0 : i64, tpu.core_type = #tpu.core_type<tc>, window_params = [{transform_indices = @transform_0, window_bounds = array<i64: 4, 8, 32>}, {pipeline_mode = #tpu.pipeline_mode<synchronous>, transform_indices = @transform_1, window_bounds = array<i64: 32, 96>}, {pipeline_mode = #tpu.pipeline_mode<synchronous>, transform_indices = @transform_2, window_bounds = array<i64: 1, 96>}, {transform_indices = @transform_3, window_bounds = array<i64: 4, 8, 32>}]} {
    %c0 = arith.constant 0 : index
    %c0_0 = arith.constant 0 : index
    %c0_1 = arith.constant 0 : index
    %0 = vector.load %arg1[%c0, %c0_0, %c0_1] : memref<4x8x32xf32, #tpu.memory_space<vmem>>, vector<4x8x32xf32>
    %1 = vector.shape_cast %0 : vector<4x8x32xf32> to vector<32x32xf32>
    %c0_2 = arith.constant 0 : index
    %c0_3 = arith.constant 0 : index
    %2 = vector.load %arg2[%c0_2, %c0_3] : memref<32x96xf32, #tpu.memory_space<vmem>>, vector<32x96xf32>
    %c0_4 = arith.constant 0 : index
    %c0_5 = arith.constant 0 : index
    %3 = vector.load %arg3[%c0_4, %c0_5] : memref<1x96xf32, #tpu.memory_space<vmem>>, vector<1x96xf32>
    %cst = arith.constant dense<0.000000e+00> : vector<32x96xf32>
    %4 = tpu.matmul %1, %2, %cst {dimension_numbers = #tpu.dot_dimension_numbers<[1], [0], [0], [1], [0, 0, 1, 1], [], []>} : vector<32x32xf32>, vector<32x96xf32>, vector<32x96xf32> -> vector<32x96xf32>
    %5 = vector.broadcast %3 : vector<1x96xf32> to vector<32x96xf32>
    %6 = arith.addf %4, %5 : vector<32x96xf32>
    %7 = vector.shape_cast %6 : vector<32x96xf32> to vector<4x8x96xf32>
    %8 = vector.extract_strided_slice %7 {offsets = [0, 0, 0], sizes = [4, 8, 32], strides = [1, 1, 1]} : vector<4x8x96xf32> to vector<4x8x32xf32>
    %cst_6 = arith.constant 0.176776692 : f32
    %9 = vector.broadcast %cst_6 : f32 to vector<4x8x32xf32>
    %10 = arith.mulf %8, %9 : vector<4x8x32xf32>
    %11 = vector.extract_strided_slice %7 {offsets = [0, 0, 32], sizes = [4, 8, 32], strides = [1, 1, 1]} : vector<4x8x96xf32> to vector<4x8x32xf32>
    %12 = vector.extract_strided_slice %7 {offsets = [0, 0, 64], sizes = [4, 8, 32], strides = [1, 1, 1]} : vector<4x8x96xf32> to vector<4x8x32xf32>
    %cst_7 = arith.constant dense<0.000000e+00> : vector<4x8x8xf32>
    %13 = tpu.matmul %10, %11, %cst_7 {dimension_numbers = #tpu.dot_dimension_numbers<[2], [2], [1], [1], [0, 0, 0, 1, 1, 1], [0], [0]>} : vector<4x8x32xf32>, vector<4x8x32xf32>, vector<4x8x8xf32> -> vector<4x8x8xf32>
    %cst_8 = arith.constant dense<0xFF800000> : vector<4x8xf32>
    %14 = vector.multi_reduction <maximumf>, %13, %cst_8 [2] : vector<4x8x8xf32> to vector<4x8xf32>
    %15 = vector.shape_cast %14 : vector<4x8xf32> to vector<4x8x1xf32>
    %16 = vector.broadcast %15 : vector<4x8x1xf32> to vector<4x8x8xf32>
    %17 = arith.subf %13, %16 : vector<4x8x8xf32>
    %18 = math.exp %17 : vector<4x8x8xf32>
    %cst_9 = arith.constant dense<0.000000e+00> : vector<4x8xf32>
    %19 = vector.multi_reduction <add>, %18, %cst_9 [2] : vector<4x8x8xf32> to vector<4x8xf32>
    %20 = vector.shape_cast %19 : vector<4x8xf32> to vector<4x8x1xf32>
    %21 = tpu.reciprocal %20 {approx = true} : vector<4x8x1xf32> -> vector<4x8x1xf32>
    %22 = vector.broadcast %21 : vector<4x8x1xf32> to vector<4x8x8xf32>
    %23 = arith.mulf %18, %22 : vector<4x8x8xf32>
    %cst_10 = arith.constant dense<0.000000e+00> : vector<4x8x32xf32>
    %24 = tpu.matmul %23, %12, %cst_10 {dimension_numbers = #tpu.dot_dimension_numbers<[2], [1], [1], [2], [0, 0, 0, 1, 1, 2], [0], [0]>} : vector<4x8x8xf32>, vector<4x8x32xf32>, vector<4x8x32xf32> -> vector<4x8x32xf32>
    %c0_11 = arith.constant 0 : index
    %c0_12 = arith.constant 0 : index
    %c0_13 = arith.constant 0 : index
    %25 = vector.load %arg4[%c0_11, %c0_12, %c0_13] : memref<4x8x32xf32, #tpu.memory_space<vmem>>, vector<4x8x32xf32>
    tpu.vector_store %arg4[%c0_11, %c0_12, %c0_13], %24 {strides = array<i32>} : memref<4x8x32xf32, #tpu.memory_space<vmem>>, vector<4x8x32xf32>,
    return
  }
  func.func @transform_0(%arg0: i32) -> (i32, i32, i32) {
    %c0_i32 = arith.constant 0 : i32
    %c0_i32_0 = arith.constant 0 : i32
    %c0_i32_1 = arith.constant 0 : i32
    return %arg0, %c0_i32, %c0_i32_0 : i32, i32, i32
  }
  func.func @transform_1(%arg0: i32) -> (i32, i32) {
    %c0_i32 = arith.constant 0 : i32
    %c0_i32_0 = arith.constant 0 : i32
    %c0_i32_1 = arith.constant 0 : i32
    return %c0_i32, %c0_i32_0 : i32, i32
  }
  func.func @transform_2(%arg0: i32) -> (i32, i32) {
    %c0_i32 = arith.constant 0 : i32
    %c0_i32_0 = arith.constant 0 : i32
    %c0_i32_1 = arith.constant 0 : i32
    return %c0_i32, %c0_i32_0 : i32, i32
  }
  func.func @transform_3(%arg0: i32) -> (i32, i32, i32) {
    %c0_i32 = arith.constant 0 : i32
    %c0_i32_0 = arith.constant 0 : i32
    %c0_i32_1 = arith.constant 0 : i32
    return %arg0, %c0_i32, %c0_i32_0 : i32, i32, i32
  }
}

</mosaic_0001>

<llo_original>
// kernel: tpu_custom_call.1
$region0: #{tpu_custom_call.1}
  #allocation0 [shape = 'u32[]', space=smem, size = 0x4, offset = 0x4, fixed_abs, tag = 'smem constant byte address 0x4 - core index']
  #allocation1 [shape = 'u32[144,128]{1,0:T(1,128)}', space=vmem, size = 0x12000, scoped, tag = 'internal scratch']
  %s0 = inlined_call_operand.hbm [shape: f32[8,8,32], index: 0, kind: input, shape index: {}]
  %s1 = inlined_call_operand.hbm [shape: f32[32,96], index: 1, kind: input, shape index: {}]
  %s2 = inlined_call_operand.vmem [shape: f32[1,96], index: 2, kind: input, shape index: {}]
  %s3 = inlined_call_operand.hbm [shape: f32[8,8,32], index: 3, kind: output, shape index: {}]
  %s4 = sld [smem:[#allocation0]]
  $region53: #{tpu_custom_call.1} parent=0
    _
  %s6 = ssub.s32 1, %s4
  %s7 = scalar_select 0, %s6, %s4
  $region1: #{tpu_custom_call.1} parent=0
    #allocation2 [shape = 'u8[32768]{0}', space=vmem, size = 0x8000, scoped, tag = 'input window, operand 0']
    #allocation3 [shape = 's32[2]{0}', space=sflag, size = 0x8, scoped, tag = 'scoped memory for tpu_custom_call.1']
    #allocation4 [shape = 's32[2]{0}', space=sflag, size = 0x8, scoped, tag = 'scoped memory for tpu_custom_call.1']
    #allocation5 [shape = 'u8[16384]{0}', space=vmem, size = 0x4000, scoped, tag = 'input window, operand 1, single buffered']
    #allocation6 [shape = 's32[1]{0}', space=sflag, size = 0x4, scoped, tag = 'scoped memory for tpu_custom_call.1']
    #allocation7 [shape = 'u8[32768]{0}', space=vmem, size = 0x8000, scoped, tag = 'output window, operand 0']
    %8 = vsyncpa [#allocation3], 0
    %s9 = scalar_lea.sflag [#allocation3], 1
    %10 = vsyncpa %s9, 0
    %11 = vsyncpa [#allocation6], 0
    %12 = vsyncpa [#allocation4], 0
    %s13 = scalar_lea.sflag [#allocation4], 1
    %14 = vsyncpa %s13, 0
    loop: start=0, step=1, limit=4
    $region2: #{tpu_custom_call.1} parent=1 // loop_pre_header
      _
    $region3: #{tpu_custom_call.1} parent=1 // loop_header
      %s16 = sphi 0, %s20
      %p17 = scmp.ge.s32.totalorder %s16, 4
      %s26 = sphi 0, %s28
      %s29 = sphi 0, %s26
      %s30 = sphi 0, %s29
      %s46 = sphi 0, %s30
      %s50 = sphi 0, %s50
      %s52 = sphi 0, %s50
      %s53 = sphi 0, %s52
      %s67 = sphi 0, %s53
      %s71 = sphi 0, %s71
      %s73 = sphi 0, %s71
      %s74 = sphi 0, %s73
      %s88 = sphi 0, %s74
      %s94 = sphi 0, %s96
      %s97 = sphi 0, %s94
      %s98 = sphi 0, %s97
      %s114 = sphi 0, %s98
    $region4: #{tpu_custom_call.1} parent=1 // loop_header_branch
      %19 = sbr.rel (%p17) target = $region8
    $region5: #{tpu_custom_call.1} parent=1 // loop_body
      %s21 = ssub.s32 %s16, 1
      %s22 = ssub.s32 %s16, 2
      %s23 = sadd.s32 %s16, 1
      %s24 = ssub.s32 %s16, %s23
      %p25 = scmp.eq.s32.totalorder %s24, 0
      %s27 = sadd.s32 %s26, 1
      %s28 = scalar_select %p25, %s26, %s27
      %p31 = pneg %p25
      %p32 = scmp.eq.s32.totalorder %s16, 1
      %p33 = por %p31, %p32
      %p34 = scmp.ne.s32.totalorder %s26, %s29
      %p35 = scmp.eq.s32.totalorder %s16, 0
      %p36 = por %p34, %p35
      %p37 = scmp.ne.s32.totalorder %s26, %s29
      %p38 = scmp.eq.s32.totalorder %s21, 1
      %p39 = por %p37, %p38
      %p40 = scmp.ne.s32.totalorder %s29, %s30
      %p41 = scmp.eq.s32.totalorder %s21, 0
      %p42 = por %p40, %p41
      %p43 = scmp.ne.s32.totalorder %s29, %s30
      %p44 = scmp.eq.s32.totalorder %s22, 1
      %p45 = por %p43, %p44
      %p47 = scmp.ne.s32.totalorder %s30, %s46
      %p48 = scmp.eq.s32.totalorder %s22, 0
      %p49 = por %p47, %p48
      %s51 = sadd.s32 %s50, 1
      %p54 = scmp.eq.s32.totalorder %s16, 1
      %p55 = scmp.ne.s32.totalorder %s50, %s52
      %p56 = scmp.eq.s32.totalorder %s16, 0
      %p57 = por %p55, %p56
      %p58 = scmp.ne.s32.totalorder %s50, %s52
      %p59 = scmp.eq.s32.totalorder %s21, 1
      %p60 = por %p58, %p59
      %p61 = scmp.ne.s32.totalorder %s52, %s53
      %p62 = scmp.eq.s32.totalorder %s21, 0
      %p63 = por %p61, %p62
      %p64 = scmp.ne.s32.totalorder %s52, %s53
      %p65 = scmp.eq.s32.totalorder %s22, 1
      %p66 = por %p64, %p65
      %p68 = scmp.ne.s32.totalorder %s53, %s67
      %p69 = scmp.eq.s32.totalorder %s22, 0
      %p70 = por %p68, %p69
      %s72 = sadd.s32 %s71, 1
      %p75 = scmp.eq.s32.totalorder %s16, 1
      %p76 = scmp.ne.s32.totalorder %s71, %s73
      %p77 = scmp.eq.s32.totalorder %s16, 0
      %p78 = por %p76, %p77
      %p79 = scmp.ne.s32.totalorder %s71, %s73
      %p80 = scmp.eq.s32.totalorder %s21, 1
      %p81 = por %p79, %p80
      %p82 = scmp.ne.s32.totalorder %s73, %s74
      %p83 = scmp.eq.s32.totalorder %s21, 0
      %p84 = por %p82, %p83
      %p85 = scmp.ne.s32.totalorder %s73, %s74
      %p86 = scmp.eq.s32.totalorder %s22, 1
      %p87 = por %p85, %p86
      %p89 = scmp.ne.s32.totalorder %s74, %s88
      %p90 = scmp.eq.s32.totalorder %s22, 0
      %p91 = por %p89, %p90
      %s92 = ssub.s32 %s16, %s23
      %p93 = scmp.eq.s32.totalorder %s92, 0
      %s95 = sadd.s32 %s94, 1
      %s96 = scalar_select %p93, %s94, %s95
      %p99 = pneg %p93
      %p100 = scmp.eq.s32.totalorder %s16, 1
      %p101 = por %p99, %p100
      %p102 = scmp.ne.s32.totalorder %s94, %s97
      %p103 = scmp.eq.s32.totalorder %s16, 0
      %p104 = por %p102, %p103
      %p105 = scmp.ne.s32.totalorder %s94, %s97
      %p106 = scmp.eq.s32.totalorder %s21, 1
      %p107 = por %p105, %p106
      %p108 = scmp.ne.s32.totalorder %s97, %s98
      %p109 = scmp.eq.s32.totalorder %s21, 0
      %p110 = por %p108, %p109
      %p111 = scmp.ne.s32.totalorder %s97, %s98
      %p112 = scmp.eq.s32.totalorder %s22, 1
      %p113 = por %p111, %p112
      %p115 = scmp.ne.s32.totalorder %s98, %s114
      %p116 = scmp.eq.s32.totalorder %s22, 0
      %p117 = por %p115, %p116
      %p118 = scmp.le.s32.totalorder 1, %s16
      %p119 = scmp.lt.s32.totalorder %s16, 3
      %p120 = pnand %p118, %p119
      %p121 = pneg %p120
      // Predicated region
      $region9: #{tpu_custom_call.1} parent=5 // pred_check
        _
      $region10: #{tpu_custom_call.1} parent=5 // pred_check_branch
        %123 = sbr.rel (%p120) target = $region12
      $region11: #{tpu_custom_call.1} parent=5 // pred_region
        %s124 = ssub.s32 %s16, 1
        // Predicated region
        $region13: #{tpu_custom_call.1} parent=11 // pred_check
          %p125 = pneg %p63
        $region14: #{tpu_custom_call.1} parent=11 // pred_check_branch
          %127 = sbr.rel (%p125) target = $region16
        $region15: #{tpu_custom_call.1} parent=11 // pred_region
          %s129 = ssub.s32 512, 512
          %130 = vsyncadd [#allocation6], %s129
          %s131 = sshll.u32 [#allocation5], 4
          %s132 = int_to_ptr.vmem [resolvable:$true] %s131
          %137 = dma.hbm_to_vmem [thread:$0]  %s1, 512, %s132, [#allocation6], 128, 128, 8
        $region16: #{tpu_custom_call.1} parent=11 // pred_fallthru
          _
        // Predicated region
        $region17: #{tpu_custom_call.1} parent=11 // pred_check
          %p138 = pneg %p84
        $region18: #{tpu_custom_call.1} parent=11 // pred_check_branch
          %140 = sbr.rel (%p138) target = $region20
        $region19: #{tpu_custom_call.1} parent=11 // pred_region
          _
        $region20: #{tpu_custom_call.1} parent=11 // pred_fallthru
          _
      $region12: #{tpu_custom_call.1} parent=5 // pred_fallthru
        _
      %p141 = scmp.lt.s32.totalorder %s16, 2
      // Predicated region
      $region21: #{tpu_custom_call.1} parent=5 // pred_check
        %p142 = pneg %p141
      $region22: #{tpu_custom_call.1} parent=5 // pred_check_branch
        %144 = sbr.rel (%p142) target = $region24
      $region23: #{tpu_custom_call.1} parent=5 // pred_region
        // Predicated region
        $region25: #{tpu_custom_call.1} parent=23 // pred_check
          %p145 = pneg %p36
        $region26: #{tpu_custom_call.1} parent=23 // pred_check_branch
          %147 = sbr.rel (%p145) target = $region28
        $region27: #{tpu_custom_call.1} parent=23 // pred_region
          %s148 = sand.u32 %s26, 1
          %s149 = scalar_lea.sflag [#allocation3], %s148
          %s150 = sand.u32 %s26, 1
          %s151 = smul.addr %s150, 32
          %s152 = scalar_lea.vmem [#allocation2], %s151
          %s153 = smul.u32 4, %s16
          %s155 = ssub.s32 512, 512
          %156 = vsyncadd %s149, %s155
          %s157 = smul.addr %s153, 128
          %s158 = scalar_lea.hbm %s0, %s157
          %s159 = sshll.u32 %s152, 4
          %s160 = int_to_ptr.vmem [resolvable:$true] %s159
          %165 = dma.hbm_to_vmem [thread:$0]  %s158, 512, %s160, %s149, 128, 128, 8
        $region28: #{tpu_custom_call.1} parent=23 // pred_fallthru
          _
      $region24: #{tpu_custom_call.1} parent=5 // pred_fallthru
        _
      %p166 = scmp.le.s32.totalorder 1, %s16
      %p167 = scmp.lt.s32.totalorder %s16, 3
      %p168 = pnand %p166, %p167
      %p169 = pneg %p168
      // Predicated region
      $region29: #{tpu_custom_call.1} parent=5 // pred_check
        _
      $region30: #{tpu_custom_call.1} parent=5 // pred_check_branch
        %171 = sbr.rel (%p168) target = $region32
      $region31: #{tpu_custom_call.1} parent=5 // pred_region
        %s172 = ssub.s32 %s16, 1
        %s173 = sand.u32 %s29, 1
        %s174 = scalar_lea.sflag [#allocation3], %s173
        %s175 = sand.u32 %s29, 1
        %s176 = smul.addr %s175, 32
        %s177 = scalar_lea.vmem [#allocation2], %s176
        // Predicated region
        $region33: #{tpu_custom_call.1} parent=31 // pred_check
          %p178 = pneg %p42
        $region34: #{tpu_custom_call.1} parent=31 // pred_check_branch
          %180 = sbr.rel (%p178) target = $region36
        $region35: #{tpu_custom_call.1} parent=31 // pred_region
          %181 = dma.done %s174, 512
        $region36: #{tpu_custom_call.1} parent=31 // pred_fallthru
          _
        // Predicated region
        $region37: #{tpu_custom_call.1} parent=31 // pred_check
          %p182 = pneg %p63
        $region38: #{tpu_custom_call.1} parent=31 // pred_check_branch
          %184 = sbr.rel (%p182) target = $region40
        $region39: #{tpu_custom_call.1} parent=31 // pred_region
          %185 = dma.done [#allocation6], 512
        $region40: #{tpu_custom_call.1} parent=31 // pred_fallthru
          _
        %s186 = sand.u32 %s29, 1
        %s187 = scalar_lea.sflag [#allocation3], %s186
        %s188 = sand.u32 %s29, 1
        %s189 = smul.addr %s188, 32
        %s190 = scalar_lea.vmem [#allocation2], %s189
        %p191 = pneg %p42
        %p192 = pneg %p39
        %p193 = pneg %p63
        %p194 = pneg %p60
        %p195 = pneg %p84
        %p196 = pneg %p81
        %p197 = pneg %p110
        %p198 = pneg %p107
        %s199 = sand.u32 %s97, 1
        %s200 = scalar_lea.sflag [#allocation4], %s199
        %s201 = sand.u32 %s97, 1
        %s202 = smul.addr %s201, 32
        %s203 = scalar_lea.vmem [#allocation7], %s202
        %s204 = smul.u32 4, %s21
        %s205 = smul.u32 4, %s21
        %v206 = vld [vmem:[%s177] sm:$0xff]
        %v207 = vld [vmem:[%s177 + $0x8] sm:$0xff]
        %v208 = vld [vmem:[%s177 + $0x10] sm:$0xff]
        %v209 = vld [vmem:[%s177 + $0x18] sm:$0xff]
        %v210 = vld [vmem:[#allocation5] sm:$0xff]
        %v211 = vld [vmem:[#allocation5 + $0x8] sm:$0xff]
        %v212 = vld [vmem:[#allocation5 + $0x10] sm:$0xff]
        %v213 = vld [vmem:[#allocation5 + $0x18] sm:$0xff]
        %v214 = vld [vmem:[%s2] sm:$0x1]
        %v216 = vlaneseq
        %v217 = vshrl.u32 %v216, 7
        %v218 = vsub.s32 0, %v217
        %v219 = vrot.slane %v214, %v218
        %vm221 = vcmask 261120
        %v223 = vsel %vm221, %v206, 0
        %v226 = vsel %vm221, %v207, 0
        %v229 = vsel %vm221, %v208, 0
        %v232 = vsel %vm221, %v209, 0
        %234 = vmatprep.subr.mxu0 0.0
        %235 = vmatpush1.msra.mxu0 %v210
        %236 = vmatprep.subr.mxu0 0.0
        %237 = vmatpush1.msra.mxu0 %v211
        %238 = vmatprep.subr.mxu0 0.0
        %239 = vmatpush1.msra.mxu0 %v212
        %240 = vmatprep.subr.mxu0 0.0
        %241 = vmatpush1.msra.mxu0 %v213
        %242 = vmatprep.subr.mxu0 0.0
        %243 = vmatpush1.msra.mxu0 0.0
        %244 = vmatprep.subr.mxu0 0.0
        %245 = vmatpush1.msra.mxu0 0.0
        %246 = vmatprep.subr.mxu0 0.0
        %247 = vmatpush1.msra.mxu0 0.0
        %248 = vmatprep.subr.mxu0 0.0
        %249 = vmatpush1.msra.mxu0 0.0
        %250 = vmatprep.subr.mxu0 0.0
        %251 = vmatpush1.msra.mxu0 0.0
        %252 = vmatprep.subr.mxu0 0.0
        %253 = vmatpush1.msra.mxu0 0.0
        %254 = vmatprep.subr.mxu0 0.0
        %255 = vmatpush1.msra.mxu0 0.0
        %256 = vmatprep.subr.mxu0 0.0
        %257 = vmatpush1.msra.mxu0 0.0
        %258 = vmatprep.subr.mxu0 0.0
        %259 = vmatpush1.msra.mxu0 0.0
        %260 = vmatprep.subr.mxu0 0.0
        %261 = vmatpush1.msra.mxu0 0.0
        %262 = vmatprep.subr.mxu0 0.0
        %263 = vmatpush1.msra.mxu0 0.0
        %264 = vmatprep.subr.mxu0 0.0
        %265 = vmatpush1.msra.mxu0 0.0
        %266 = vmatprep.subr.mxu0 0.0
        %267 = vmatpush1.msra.mxu0 0.0
        %268 = vmatprep.subr.mxu0 0.0
        %269 = vmatpush1.msra.mxu0 0.0
        %270 = vmatprep.subr.mxu0 0.0
        %271 = vmatpush1.msra.mxu0 0.0
        %272 = vmatprep.subr.mxu0 0.0
        %273 = vmatpush1.msra.mxu0 0.0
        %274 = vmatprep.subr.mxu0 0.0
        %275 = vmatpush1.msra.mxu0 0.0
        %276 = vmatprep.subr.mxu0 0.0
        %277 = vmatpush1.msra.mxu0 0.0
        %278 = vmatprep.subr.mxu0 0.0
        %279 = vmatpush1.msra.mxu0 0.0
        %280 = vmatprep.subr.mxu0 0.0
        %281 = vmatpush1.msra.mxu0 0.0
        %282 = vmatprep.subr.mxu0 0.0
        %283 = vmatpush1.msra.mxu0 0.0
        %284 = vmatprep.subr.mxu0 0.0
        %285 = vmatpush1.msra.mxu0 0.0
        %286 = vmatprep.subr.mxu0 0.0
        %287 = vmatpush1.msra.mxu0 0.0
        %288 = vmatprep.subr.mxu0 0.0
        %289 = vmatpush1.msra.mxu0 0.0
        %290 = vmatprep.subr.mxu0 0.0
        %291 = vmatpush1.msra.mxu0 0.0
        %292 = vmatprep.subr.mxu0 0.0
        %293 = vmatpush1.msra.mxu0 0.0
        %294 = vmatprep.subr.mxu0 0.0
        %295 = vmatpush1.msra.mxu0 0.0
        %296 = vmatprep.subr.mxu0 0.0
        %297 = vmatpush1.msra.mxu0 0.0
        %298 = vmatprep.mubr.f32.mxu0 0.0
        %299 = vmatmul.mubr.f32.gmra.mrb[0].mxu0 %v223
        %v300 = vpop.f32.mrb[0].mxu0
        %v301 = vadd.f32 %v219, %v300
        %v302 = vpop.f32.mrb[0].mxu0
        %303 = vmatprep.mubr.f32.mxu0 0.0
        %304 = vmatmul.mubr.f32.gmra.mrb[0].mxu0 %v226
        %v305 = vpop.f32.mrb[0].mxu0
        %v306 = vadd.f32 %v219, %v305
        %v307 = vpop.f32.mrb[0].mxu0
        %308 = vmatprep.mubr.f32.mxu0 0.0
        %309 = vmatmul.mubr.f32.gmra.mrb[0].mxu0 %v229
        %v310 = vpop.f32.mrb[0].mxu0
        %v311 = vadd.f32 %v219, %v310
        %v312 = vpop.f32.mrb[0].mxu0
        %313 = vmatprep.mubr.f32.mxu0 0.0
        %314 = vmatmul.mubr.f32.gmra.mrb[0].mxu0 %v232
        %v315 = vpop.f32.mrb[0].mxu0
        %v316 = vadd.f32 %v219, %v315
        %v317 = vpop.f32.mrb[0].mxu0
        %318 = vdwg.mxu0
        %v319 = vmul.f32 %v301, 0.17677669
        %v320 = vmul.f32 %v306, 0.17677669
        %v321 = vmul.f32 %v311, 0.17677669
        %v322 = vmul.f32 %v316, 0.17677669
        %324 = vrot.lane.b32.xlu0 %v301, 96
        %v325 = vpop.permute.xlu0 %324
        %v327 = vsel %vm221, %v319, 0
        %v329 = vsel %vm221, %v325, 0
        %331 = vmatprep.subr.mxu0 0.0
        %332 = vmatpush1.xpose.msra.mxu0 %v329
        %333 = vmatprep.subr.mxu0 0.0
        %334 = vmatpush1.xpose.msra.mxu0 0.0
        %335 = vmatprep.subr.mxu0 0.0
        %336 = vmatpush1.xpose.msra.mxu0 0.0
        %337 = vmatprep.subr.mxu0 0.0
        %338 = vmatpush1.xpose.msra.mxu0 0.0
        %339 = vmatprep.subr.mxu0 0.0
        %340 = vmatpush1.xpose.msra.mxu0 0.0
        %341 = vmatprep.subr.mxu0 0.0
        %342 = vmatpush1.xpose.msra.mxu0 0.0
        %343 = vmatprep.subr.mxu0 0.0
        %344 = vmatpush1.xpose.msra.mxu0 0.0
        %345 = vmatprep.subr.mxu0 0.0
        %346 = vmatpush1.xpose.msra.mxu0 0.0
        %347 = vmatprep.subr.mxu0 0.0
        %348 = vmatpush1.xpose.msra.mxu0 0.0
        %349 = vmatprep.subr.mxu0 0.0
        %350 = vmatpush1.xpose.msra.mxu0 0.0
        %351 = vmatprep.subr.mxu0 0.0
        %352 = vmatpush1.xpose.msra.mxu0 0.0
        %353 = vmatprep.subr.mxu0 0.0
        %354 = vmatpush1.xpose.msra.mxu0 0.0
        %355 = vmatprep.subr.mxu0 0.0
        %356 = vmatpush1.xpose.msra.mxu0 0.0
        %357 = vmatprep.subr.mxu0 0.0
        %358 = vmatpush1.xpose.msra.mxu0 0.0
        %359 = vmatprep.subr.mxu0 0.0
        %360 = vmatpush1.xpose.msra.mxu0 0.0
        %361 = vmatprep.subr.mxu0 0.0
        %362 = vmatpush1.xpose.msra.mxu0 0.0
        %363 = vmatprep.subr.mxu0 0.0
        %364 = vmatpush1.xpose.msra.mxu0 0.0
        %365 = vmatprep.subr.mxu0 0.0
        %366 = vmatpush1.xpose.msra.mxu0 0.0
        %367 = vmatprep.subr.mxu0 0.0
        %368 = vmatpush1.xpose.msra.mxu0 0.0
        %369 = vmatprep.subr.mxu0 0.0
        %370 = vmatpush1.xpose.msra.mxu0 0.0
        %371 = vmatprep.subr.mxu0 0.0
        %372 = vmatpush1.xpose.msra.mxu0 0.0
        %373 = vmatprep.subr.mxu0 0.0
        %374 = vmatpush1.xpose.msra.mxu0 0.0
        %375 = vmatprep.subr.mxu0 0.0
        %376 = vmatpush1.xpose.msra.mxu0 0.0
        %377 = vmatprep.subr.mxu0 0.0
        %378 = vmatpush1.xpose.msra.mxu0 0.0
        %379 = vmatprep.subr.mxu0 0.0
        %380 = vmatpush1.xpose.msra.mxu0 0.0
        %381 = vmatprep.subr.mxu0 0.0
        %382 = vmatpush1.xpose.msra.mxu0 0.0
        %383 = vmatprep.subr.mxu0 0.0
        %384 = vmatpush1.xpose.msra.mxu0 0.0
        %385 = vmatprep.subr.mxu0 0.0
        %386 = vmatpush1.xpose.msra.mxu0 0.0
        %387 = vmatprep.subr.mxu0 0.0
        %388 = vmatpush1.xpose.msra.mxu0 0.0
        %389 = vmatprep.subr.mxu0 0.0
        %390 = vmatpush1.xpose.msra.mxu0 0.0
        %391 = vmatprep.subr.mxu0 0.0
        %392 = vmatpush1.xpose.msra.mxu0 0.0
        %393 = vmatprep.subr.mxu0 0.0
        %394 = vmatpush1.xpose.msra.mxu0 0.0
        %395 = vmatprep.mubr.f32.mxu0 0.0
        %396 = vmatmul.mubr.f32.gmra.mrb[0].mxu0 %v327
        %v397 = vpop.f32.mrb[0].mxu0
        %v398 = vadd.f32 0.0, %v397
        %v399 = vpop.f32.mrb[0].mxu0
        %400 = vdwg.mxu0
        %402 = vrot.lane.b32.xlu0 %v306, 96
        %v403 = vpop.permute.xlu0 %402
        %v405 = vsel %vm221, %v320, 0
        %v407 = vsel %vm221, %v403, 0
        %409 = vmatprep.subr.mxu0 0.0
        %410 = vmatpush1.xpose.msra.mxu0 %v407
        %411 = vmatprep.subr.mxu0 0.0
        %412 = vmatpush1.xpose.msra.mxu0 0.0
        %413 = vmatprep.subr.mxu0 0.0
        %414 = vmatpush1.xpose.msra.mxu0 0.0
        %415 = vmatprep.subr.mxu0 0.0
        %416 = vmatpush1.xpose.msra.mxu0 0.0
        %417 = vmatprep.subr.mxu0 0.0
        %418 = vmatpush1.xpose.msra.mxu0 0.0
        %419 = vmatprep.subr.mxu0 0.0
        %420 = vmatpush1.xpose.msra.mxu0 0.0
        %421 = vmatprep.subr.mxu0 0.0
        %422 = vmatpush1.xpose.msra.mxu0 0.0
        %423 = vmatprep.subr.mxu0 0.0
        %424 = vmatpush1.xpose.msra.mxu0 0.0
        %425 = vmatprep.subr.mxu0 0.0
        %426 = vmatpush1.xpose.msra.mxu0 0.0
        %427 = vmatprep.subr.mxu0 0.0
        %428 = vmatpush1.xpose.msra.mxu0 0.0
        %429 = vmatprep.subr.mxu0 0.0
        %430 = vmatpush1.xpose.msra.mxu0 0.0
        %431 = vmatprep.subr.mxu0 0.0
        %432 = vmatpush1.xpose.msra.mxu0 0.0
        %433 = vmatprep.subr.mxu0 0.0
        %434 = vmatpush1.xpose.msra.mxu0 0.0
        %435 = vmatprep.subr.mxu0 0.0
        %436 = vmatpush1.xpose.msra.mxu0 0.0
        %437 = vmatprep.subr.mxu0 0.0
        %438 = vmatpush1.xpose.msra.mxu0 0.0
        %439 = vmatprep.subr.mxu0 0.0
        %440 = vmatpush1.xpose.msra.mxu0 0.0
        %441 = vmatprep.subr.mxu0 0.0
        %442 = vmatpush1.xpose.msra.mxu0 0.0
        %443 = vmatprep.subr.mxu0 0.0
        %444 = vmatpush1.xpose.msra.mxu0 0.0
        %445 = vmatprep.subr.mxu0 0.0
        %446 = vmatpush1.xpose.msra.mxu0 0.0
        %447 = vmatprep.subr.mxu0 0.0
        %448 = vmatpush1.xpose.msra.mxu0 0.0
        %449 = vmatprep.subr.mxu0 0.0
        %450 = vmatpush1.xpose.msra.mxu0 0.0
        %451 = vmatprep.subr.mxu0 0.0
        %452 = vmatpush1.xpose.msra.mxu0 0.0
        %453 = vmatprep.subr.mxu0 0.0
        %454 = vmatpush1.xpose.msra.mxu0 0.0
        %455 = vmatprep.subr.mxu0 0.0
        %456 = vmatpush1.xpose.msra.mxu0 0.0
        %457 = vmatprep.subr.mxu0 0.0
        %458 = vmatpush1.xpose.msra.mxu0 0.0
        %459 = vmatprep.subr.mxu0 0.0
        %460 = vmatpush1.xpose.msra.mxu0 0.0
        %461 = vmatprep.subr.mxu0 0.0
        %462 = vmatpush1.xpose.msra.mxu0 0.0
        %463 = vmatprep.subr.mxu0 0.0
        %464 = vmatpush1.xpose.msra.mxu0 0.0
        %465 = vmatprep.subr.mxu0 0.0
        %466 = vmatpush1.xpose.msra.mxu0 0.0
        %467 = vmatprep.subr.mxu0 0.0
        %468 = vmatpush1.xpose.msra.mxu0 0.0
        %469 = vmatprep.subr.mxu0 0.0
        %470 = vmatpush1.xpose.msra.mxu0 0.0
        %471 = vmatprep.subr.mxu0 0.0
        %472 = vmatpush1.xpose.msra.mxu0 0.0
        %473 = vmatprep.mubr.f32.mxu0 0.0
        %474 = vmatmul.mubr.f32.gmra.mrb[0].mxu0 %v405
        %v475 = vpop.f32.mrb[0].mxu0
        %v476 = vadd.f32 0.0, %v475
        %v477 = vpop.f32.mrb[0].mxu0
        %478 = vdwg.mxu0
        %480 = vrot.lane.b32.xlu0 %v311, 96
        %v481 = vpop.permute.xlu0 %480
        %v483 = vsel %vm221, %v321, 0
        %v485 = vsel %vm221, %v481, 0
        %487 = vmatprep.subr.mxu0 0.0
        %488 = vmatpush1.xpose.msra.mxu0 %v485
        %489 = vmatprep.subr.mxu0 0.0
        %490 = vmatpush1.xpose.msra.mxu0 0.0
        %491 = vmatprep.subr.mxu0 0.0
        %492 = vmatpush1.xpose.msra.mxu0 0.0
        %493 = vmatprep.subr.mxu0 0.0
        %494 = vmatpush1.xpose.msra.mxu0 0.0
        %495 = vmatprep.subr.mxu0 0.0
        %496 = vmatpush1.xpose.msra.mxu0 0.0
        %497 = vmatprep.subr.mxu0 0.0
        %498 = vmatpush1.xpose.msra.mxu0 0.0
        %499 = vmatprep.subr.mxu0 0.0
        %500 = vmatpush1.xpose.msra.mxu0 0.0
        %501 = vmatprep.subr.mxu0 0.0
        %502 = vmatpush1.xpose.msra.mxu0 0.0
        %503 = vmatprep.subr.mxu0 0.0
        %504 = vmatpush1.xpose.msra.mxu0 0.0
        %505 = vmatprep.subr.mxu0 0.0
        %506 = vmatpush1.xpose.msra.mxu0 0.0
        %507 = vmatprep.subr.mxu0 0.0
        %508 = vmatpush1.xpose.msra.mxu0 0.0
        %509 = vmatprep.subr.mxu0 0.0
        %510 = vmatpush1.xpose.msra.mxu0 0.0
        %511 = vmatprep.subr.mxu0 0.0
        %512 = vmatpush1.xpose.msra.mxu0 0.0
        %513 = vmatprep.subr.mxu0 0.0
        %514 = vmatpush1.xpose.msra.mxu0 0.0
        %515 = vmatprep.subr.mxu0 0.0
        %516 = vmatpush1.xpose.msra.mxu0 0.0
        %517 = vmatprep.subr.mxu0 0.0
        %518 = vmatpush1.xpose.msra.mxu0 0.0
        %519 = vmatprep.subr.mxu0 0.0
        %520 = vmatpush1.xpose.msra.mxu0 0.0
        %521 = vmatprep.subr.mxu0 0.0
        %522 = vmatpush1.xpose.msra.mxu0 0.0
        %523 = vmatprep.subr.mxu0 0.0
        %524 = vmatpush1.xpose.msra.mxu0 0.0
        %525 = vmatprep.subr.mxu0 0.0
        %526 = vmatpush1.xpose.msra.mxu0 0.0
        %527 = vmatprep.subr.mxu0 0.0
        %528 = vmatpush1.xpose.msra.mxu0 0.0
        %529 = vmatprep.subr.mxu0 0.0
        %530 = vmatpush1.xpose.msra.mxu0 0.0
        %531 = vmatprep.subr.mxu0 0.0
        %532 = vmatpush1.xpose.msra.mxu0 0.0
        %533 = vmatprep.subr.mxu0 0.0
        %534 = vmatpush1.xpose.msra.mxu0 0.0
        %535 = vmatprep.subr.mxu0 0.0
        %536 = vmatpush1.xpose.msra.mxu0 0.0
        %537 = vmatprep.subr.mxu0 0.0
        %538 = vmatpush1.xpose.msra.mxu0 0.0
        %539 = vmatprep.subr.mxu0 0.0
        %540 = vmatpush1.xpose.msra.mxu0 0.0
        %541 = vmatprep.subr.mxu0 0.0
        %542 = vmatpush1.xpose.msra.mxu0 0.0
        %543 = vmatprep.subr.mxu0 0.0
        %544 = vmatpush1.xpose.msra.mxu0 0.0
        %545 = vmatprep.subr.mxu0 0.0
        %546 = vmatpush1.xpose.msra.mxu0 0.0
        %547 = vmatprep.subr.mxu0 0.0
        %548 = vmatpush1.xpose.msra.mxu0 0.0
        %549 = vmatprep.subr.mxu0 0.0
        %550 = vmatpush1.xpose.msra.mxu0 0.0
        %551 = vmatprep.mubr.f32.mxu0 0.0
        %552 = vmatmul.mubr.f32.gmra.mrb[0].mxu0 %v483
        %v553 = vpop.f32.mrb[0].mxu0
        %v554 = vadd.f32 0.0, %v553
        %v555 = vpop.f32.mrb[0].mxu0
        %556 = vdwg.mxu0
        %558 = vrot.lane.b32.xlu0 %v316, 96
        %v559 = vpop.permute.xlu0 %558
        %v561 = vsel %vm221, %v322, 0
        %v563 = vsel %vm221, %v559, 0
        %565 = vmatprep.subr.mxu0 0.0
        %566 = vmatpush1.xpose.msra.mxu0 %v563
        %567 = vmatprep.subr.mxu0 0.0
        %568 = vmatpush1.xpose.msra.mxu0 0.0
        %569 = vmatprep.subr.mxu0 0.0
        %570 = vmatpush1.xpose.msra.mxu0 0.0
        %571 = vmatprep.subr.mxu0 0.0
        %572 = vmatpush1.xpose.msra.mxu0 0.0
        %573 = vmatprep.subr.mxu0 0.0
        %574 = vmatpush1.xpose.msra.mxu0 0.0
        %575 = vmatprep.subr.mxu0 0.0
        %576 = vmatpush1.xpose.msra.mxu0 0.0
        %577 = vmatprep.subr.mxu0 0.0
        %578 = vmatpush1.xpose.msra.mxu0 0.0
        %579 = vmatprep.subr.mxu0 0.0
        %580 = vmatpush1.xpose.msra.mxu0 0.0
        %581 = vmatprep.subr.mxu0 0.0
        %582 = vmatpush1.xpose.msra.mxu0 0.0
        %583 = vmatprep.subr.mxu0 0.0
        %584 = vmatpush1.xpose.msra.mxu0 0.0
        %585 = vmatprep.subr.mxu0 0.0
        %586 = vmatpush1.xpose.msra.mxu0 0.0
        %587 = vmatprep.subr.mxu0 0.0
        %588 = vmatpush1.xpose.msra.mxu0 0.0
        %589 = vmatprep.subr.mxu0 0.0
        %590 = vmatpush1.xpose.msra.mxu0 0.0
        %591 = vmatprep.subr.mxu0 0.0
        %592 = vmatpush1.xpose.msra.mxu0 0.0
        %593 = vmatprep.subr.mxu0 0.0
        %594 = vmatpush1.xpose.msra.mxu0 0.0
        %595 = vmatprep.subr.mxu0 0.0
        %596 = vmatpush1.xpose.msra.mxu0 0.0
        %597 = vmatprep.subr.mxu0 0.0
        %598 = vmatpush1.xpose.msra.mxu0 0.0
        %599 = vmatprep.subr.mxu0 0.0
        %600 = vmatpush1.xpose.msra.mxu0 0.0
        %601 = vmatprep.subr.mxu0 0.0
        %602 = vmatpush1.xpose.msra.mxu0 0.0
        %603 = vmatprep.subr.mxu0 0.0
        %604 = vmatpush1.xpose.msra.mxu0 0.0
        %605 = vmatprep.subr.mxu0 0.0
        %606 = vmatpush1.xpose.msra.mxu0 0.0
        %607 = vmatprep.subr.mxu0 0.0
        %608 = vmatpush1.xpose.msra.mxu0 0.0
        %609 = vmatprep.subr.mxu0 0.0
        %610 = vmatpush1.xpose.msra.mxu0 0.0
        %611 = vmatprep.subr.mxu0 0.0
        %612 = vmatpush1.xpose.msra.mxu0 0.0
        %613 = vmatprep.subr.mxu0 0.0
        %614 = vmatpush1.xpose.msra.mxu0 0.0
        %615 = vmatprep.subr.mxu0 0.0
        %616 = vmatpush1.xpose.msra.mxu0 0.0
        %617 = vmatprep.subr.mxu0 0.0
        %618 = vmatpush1.xpose.msra.mxu0 0.0
        %619 = vmatprep.subr.mxu0 0.0
        %620 = vmatpush1.xpose.msra.mxu0 0.0
        %621 = vmatprep.subr.mxu0 0.0
        %622 = vmatpush1.xpose.msra.mxu0 0.0
        %623 = vmatprep.subr.mxu0 0.0
        %624 = vmatpush1.xpose.msra.mxu0 0.0
        %625 = vmatprep.subr.mxu0 0.0
        %626 = vmatpush1.xpose.msra.mxu0 0.0
        %627 = vmatprep.subr.mxu0 0.0
        %628 = vmatpush1.xpose.msra.mxu0 0.0
        %629 = vmatprep.mubr.f32.mxu0 0.0
        %630 = vmatmul.mubr.f32.gmra.mrb[0].mxu0 %v561
        %v631 = vpop.f32.mrb[0].mxu0
        %v632 = vadd.f32 0.0, %v631
        %v633 = vpop.f32.mrb[0].mxu0
        %634 = vdwg.mxu0
        %vm635 = vcmask 64512
        %v636 = vsel %vm635, %v398, -inf
        %637 = vmax.xlane.f32.xlu0 %v636
        %v638 = vpop.xlane.xlu0 %637
        %v639 = vsel %vm635, %v476, -inf
        %640 = vmax.xlane.f32.xlu0 %v639
        %v641 = vpop.xlane.xlu0 %640
        %v642 = vsel %vm635, %v554, -inf
        %643 = vmax.xlane.f32.xlu0 %v642
        %v644 = vpop.xlane.xlu0 %643
        %v645 = vsel %vm635, %v632, -inf
        %646 = vmax.xlane.f32.xlu0 %v645
        %v647 = vpop.xlane.xlu0 %646
        %v648 = vsub.f32 %v398, %v638
        %v649 = vsub.f32 %v476, %v641
        %v650 = vsub.f32 %v554, %v644
        %v651 = vsub.f32 %v632, %v647
        %v652 = vmul.f32 %v648, 1.442695
        %v653 = vpow.pop %v652
        %v654 = vmul.f32 %v649, 1.442695
        %v655 = vpow.pop %v654
        %v656 = vmul.f32 %v650, 1.442695
        %v657 = vpow.pop %v656
        %v658 = vmul.f32 %v651, 1.442695
        %v659 = vpow.pop %v658
        %v660 = vsel %vm635, %v653, 0.0
        %661 = vadd.xlane.f32.xlu0 %v660
        %v662 = vpop.xlane.xlu0 %661
        %v663 = vsel %vm635, %v655, 0.0
        %664 = vadd.xlane.f32.xlu0 %v663
        %v665 = vpop.xlane.xlu0 %664
        %v666 = vsel %vm635, %v657, 0.0
        %667 = vadd.xlane.f32.xlu0 %v666
        %v668 = vpop.xlane.xlu0 %667
        %v669 = vsel %vm635, %v659, 0.0
        %670 = vadd.xlane.f32.xlu0 %v669
        %v671 = vpop.xlane.xlu0 %670
        %v672 = vrcp.pop %v662
        %v673 = vrcp.pop %v665
        %v674 = vrcp.pop %v668
        %v675 = vrcp.pop %v671
        %v676 = vmul.f32 %v653, %v672
        %v677 = vmul.f32 %v655, %v673
        %v678 = vmul.f32 %v657, %v674
        %v679 = vmul.f32 %v659, %v675
        %680 = vrot.lane.b32.xlu0 %v301, 64
        %v681 = vpop.permute.xlu0 %680
        %v684 = vsel %vm635, %v676, 0
        %686 = vmatprep.subr.mxu0 0.0
        %687 = vmatpush1.msra.mxu0 %v681
        %688 = vmatprep.subr.mxu0 0.0
        %689 = vmatpush1.msra.mxu0 0.0
        %690 = vmatprep.subr.mxu0 0.0
        %691 = vmatpush1.msra.mxu0 0.0
        %692 = vmatprep.subr.mxu0 0.0
        %693 = vmatpush1.msra.mxu0 0.0
        %694 = vmatprep.subr.mxu0 0.0
        %695 = vmatpush1.msra.mxu0 0.0
        %696 = vmatprep.subr.mxu0 0.0
        %697 = vmatpush1.msra.mxu0 0.0
        %698 = vmatprep.subr.mxu0 0.0
        %699 = vmatpush1.msra.mxu0 0.0
        %700 = vmatprep.subr.mxu0 0.0
        %701 = vmatpush1.msra.mxu0 0.0
        %702 = vmatprep.subr.mxu0 0.0
        %703 = vmatpush1.msra.mxu0 0.0
        %704 = vmatprep.subr.mxu0 0.0
        %705 = vmatpush1.msra.mxu0 0.0
        %706 = vmatprep.subr.mxu0 0.0
        %707 = vmatpush1.msra.mxu0 0.0
        %708 = vmatprep.subr.mxu0 0.0
        %709 = vmatpush1.msra.mxu0 0.0
        %710 = vmatprep.subr.mxu0 0.0
        %711 = vmatpush1.msra.mxu0 0.0
        %712 = vmatprep.subr.mxu0 0.0
        %713 = vmatpush1.msra.mxu0 0.0
        %714 = vmatprep.subr.mxu0 0.0
        %715 = vmatpush1.msra.mxu0 0.0
        %716 = vmatprep.subr.mxu0 0.0
        %717 = vmatpush1.msra.mxu0 0.0
        %718 = vmatprep.subr.mxu0 0.0
        %719 = vmatpush1.msra.mxu0 0.0
        %720 = vmatprep.subr.mxu0 0.0
        %721 = vmatpush1.msra.mxu0 0.0
        %722 = vmatprep.subr.mxu0 0.0
        %723 = vmatpush1.msra.mxu0 0.0
        %724 = vmatprep.subr.mxu0 0.0
        %725 = vmatpush1.msra.mxu0 0.0
        %726 = vmatprep.subr.mxu0 0.0
        %727 = vmatpush1.msra.mxu0 0.0
        %728 = vmatprep.subr.mxu0 0.0
        %729 = vmatpush1.msra.mxu0 0.0
        %730 = vmatprep.subr.mxu0 0.0
        %731 = vmatpush1.msra.mxu0 0.0
        %732 = vmatprep.subr.mxu0 0.0
        %733 = vmatpush1.msra.mxu0 0.0
        %734 = vmatprep.subr.mxu0 0.0
        %735 = vmatpush1.msra.mxu0 0.0
        %736 = vmatprep.subr.mxu0 0.0
        %737 = vmatpush1.msra.mxu0 0.0
        %738 = vmatprep.subr.mxu0 0.0
        %739 = vmatpush1.msra.mxu0 0.0
        %740 = vmatprep.subr.mxu0 0.0
        %741 = vmatpush1.msra.mxu0 0.0
        %742 = vmatprep.subr.mxu0 0.0
        %743 = vmatpush1.msra.mxu0 0.0
        %744 = vmatprep.subr.mxu0 0.0
        %745 = vmatpush1.msra.mxu0 0.0
        %746 = vmatprep.subr.mxu0 0.0
        %747 = vmatpush1.msra.mxu0 0.0
        %748 = vmatprep.subr.mxu0 0.0
        %749 = vmatpush1.msra.mxu0 0.0
        %750 = vmatprep.mubr.f32.mxu0 0.0
        %751 = vmatmul.mubr.f32.gmra.mrb[0].mxu0 %v684
        %v752 = vpop.f32.mrb[0].mxu0
        %v753 = vadd.f32 0.0, %v752
        %v754 = vpop.f32.mrb[0].mxu0
        %755 = vdwg.mxu0
        %756 = vrot.lane.b32.xlu0 %v306, 64
        %v757 = vpop.permute.xlu0 %756
        %v760 = vsel %vm635, %v677, 0
        %762 = vmatprep.subr.mxu0 0.0
        %763 = vmatpush1.msra.mxu0 %v757
        %764 = vmatprep.subr.mxu0 0.0
        %765 = vmatpush1.msra.mxu0 0.0
        %766 = vmatprep.subr.mxu0 0.0
        %767 = vmatpush1.msra.mxu0 0.0
        %768 = vmatprep.subr.mxu0 0.0
        %769 = vmatpush1.msra.mxu0 0.0
        %770 = vmatprep.subr.mxu0 0.0
        %771 = vmatpush1.msra.mxu0 0.0
        %772 = vmatprep.subr.mxu0 0.0
        %773 = vmatpush1.msra.mxu0 0.0
        %774 = vmatprep.subr.mxu0 0.0
        %775 = vmatpush1.msra.mxu0 0.0
        %776 = vmatprep.subr.mxu0 0.0
        %777 = vmatpush1.msra.mxu0 0.0
        %778 = vmatprep.subr.mxu0 0.0
        %779 = vmatpush1.msra.mxu0 0.0
        %780 = vmatprep.subr.mxu0 0.0
        %781 = vmatpush1.msra.mxu0 0.0
        %782 = vmatprep.subr.mxu0 0.0
        %783 = vmatpush1.msra.mxu0 0.0
        %784 = vmatprep.subr.mxu0 0.0
        %785 = vmatpush1.msra.mxu0 0.0
        %786 = vmatprep.subr.mxu0 0.0
        %787 = vmatpush1.msra.mxu0 0.0
        %788 = vmatprep.subr.mxu0 0.0
        %789 = vmatpush1.msra.mxu0 0.0
        %790 = vmatprep.subr.mxu0 0.0
        %791 = vmatpush1.msra.mxu0 0.0
        %792 = vmatprep.subr.mxu0 0.0
        %793 = vmatpush1.msra.mxu0 0.0
        %794 = vmatprep.subr.mxu0 0.0
        %795 = vmatpush1.msra.mxu0 0.0
        %796 = vmatprep.subr.mxu0 0.0
        %797 = vmatpush1.msra.mxu0 0.0
        %798 = vmatprep.subr.mxu0 0.0
        %799 = vmatpush1.msra.mxu0 0.0
        %800 = vmatprep.subr.mxu0 0.0
        %801 = vmatpush1.msra.mxu0 0.0
        %802 = vmatprep.subr.mxu0 0.0
        %803 = vmatpush1.msra.mxu0 0.0
        %804 = vmatprep.subr.mxu0 0.0
        %805 = vmatpush1.msra.mxu0 0.0
        %806 = vmatprep.subr.mxu0 0.0
        %807 = vmatpush1.msra.mxu0 0.0
        %808 = vmatprep.subr.mxu0 0.0
        %809 = vmatpush1.msra.mxu0 0.0
        %810 = vmatprep.subr.mxu0 0.0
        %811 = vmatpush1.msra.mxu0 0.0
        %812 = vmatprep.subr.mxu0 0.0
        %813 = vmatpush1.msra.mxu0 0.0
        %814 = vmatprep.subr.mxu0 0.0
        %815 = vmatpush1.msra.mxu0 0.0
        %816 = vmatprep.subr.mxu0 0.0
        %817 = vmatpush1.msra.mxu0 0.0
        %818 = vmatprep.subr.mxu0 0.0
        %819 = vmatpush1.msra.mxu0 0.0
        %820 = vmatprep.subr.mxu0 0.0
        %821 = vmatpush1.msra.mxu0 0.0
        %822 = vmatprep.subr.mxu0 0.0
        %823 = vmatpush1.msra.mxu0 0.0
        %824 = vmatprep.subr.mxu0 0.0
        %825 = vmatpush1.msra.mxu0 0.0
        %826 = vmatprep.mubr.f32.mxu0 0.0
        %827 = vmatmul.mubr.f32.gmra.mrb[0].mxu0 %v760
        %v828 = vpop.f32.mrb[0].mxu0
        %v829 = vadd.f32 0.0, %v828
        %v830 = vpop.f32.mrb[0].mxu0
        %831 = vdwg.mxu0
        %832 = vrot.lane.b32.xlu0 %v311, 64
        %v833 = vpop.permute.xlu0 %832
        %v836 = vsel %vm635, %v678, 0
        %838 = vmatprep.subr.mxu0 0.0
        %839 = vmatpush1.msra.mxu0 %v833
        %840 = vmatprep.subr.mxu0 0.0
        %841 = vmatpush1.msra.mxu0 0.0
        %842 = vmatprep.subr.mxu0 0.0
        %843 = vmatpush1.msra.mxu0 0.0
        %844 = vmatprep.subr.mxu0 0.0
        %845 = vmatpush1.msra.mxu0 0.0
        %846 = vmatprep.subr.mxu0 0.0
        %847 = vmatpush1.msra.mxu0 0.0
        %848 = vmatprep.subr.mxu0 0.0
        %849 = vmatpush1.msra.mxu0 0.0
        %850 = vmatprep.subr.mxu0 0.0
        %851 = vmatpush1.msra.mxu0 0.0
        %852 = vmatprep.subr.mxu0 0.0
        %853 = vmatpush1.msra.mxu0 0.0
        %854 = vmatprep.subr.mxu0 0.0
        %855 = vmatpush1.msra.mxu0 0.0
        %856 = vmatprep.subr.mxu0 0.0
        %857 = vmatpush1.msra.mxu0 0.0
        %858 = vmatprep.subr.mxu0 0.0
        %859 = vmatpush1.msra.mxu0 0.0
        %860 = vmatprep.subr.mxu0 0.0
        %861 = vmatpush1.msra.mxu0 0.0
        %862 = vmatprep.subr.mxu0 0.0
        %863 = vmatpush1.msra.mxu0 0.0
        %864 = vmatprep.subr.mxu0 0.0
        %865 = vmatpush1.msra.mxu0 0.0
        %866 = vmatprep.subr.mxu0 0.0
        %867 = vmatpush1.msra.mxu0 0.0
        %868 = vmatprep.subr.mxu0 0.0
        %869 = vmatpush1.msra.mxu0 0.0
        %870 = vmatprep.subr.mxu0 0.0
        %871 = vmatpush1.msra.mxu0 0.0
        %872 = vmatprep.subr.mxu0 0.0
        %873 = vmatpush1.msra.mxu0 0.0
        %874 = vmatprep.subr.mxu0 0.0
        %875 = vmatpush1.msra.mxu0 0.0
        %876 = vmatprep.subr.mxu0 0.0
        %877 = vmatpush1.msra.mxu0 0.0
        %878 = vmatprep.subr.mxu0 0.0
        %879 = vmatpush1.msra.mxu0 0.0
        %880 = vmatprep.subr.mxu0 0.0
        %881 = vmatpush1.msra.mxu0 0.0
        %882 = vmatprep.subr.mxu0 0.0
        %883 = vmatpush1.msra.mxu0 0.0
        %884 = vmatprep.subr.mxu0 0.0
        %885 = vmatpush1.msra.mxu0 0.0
        %886 = vmatprep.subr.mxu0 0.0
        %887 = vmatpush1.msra.mxu0 0.0
        %888 = vmatprep.subr.mxu0 0.0
        %889 = vmatpush1.msra.mxu0 0.0
        %890 = vmatprep.subr.mxu0 0.0
        %891 = vmatpush1.msra.mxu0 0.0
        %892 = vmatprep.subr.mxu0 0.0
        %893 = vmatpush1.msra.mxu0 0.0
        %894 = vmatprep.subr.mxu0 0.0
        %895 = vmatpush1.msra.mxu0 0.0
        %896 = vmatprep.subr.mxu0 0.0
        %897 = vmatpush1.msra.mxu0 0.0
        %898 = vmatprep.subr.mxu0 0.0
        %899 = vmatpush1.msra.mxu0 0.0
        %900 = vmatprep.subr.mxu0 0.0
        %901 = vmatpush1.msra.mxu0 0.0
        %902 = vmatprep.mubr.f32.mxu0 0.0
        %903 = vmatmul.mubr.f32.gmra.mrb[0].mxu0 %v836
        %v904 = vpop.f32.mrb[0].mxu0
        %v905 = vadd.f32 0.0, %v904
        %v906 = vpop.f32.mrb[0].mxu0
        %907 = vdwg.mxu0
        %908 = vrot.lane.b32.xlu0 %v316, 64
        %v909 = vpop.permute.xlu0 %908
        %v912 = vsel %vm635, %v679, 0
        %914 = vmatprep.subr.mxu0 0.0
        %915 = vmatpush1.msra.mxu0 %v909
        %916 = vmatprep.subr.mxu0 0.0
        %917 = vmatpush1.msra.mxu0 0.0
        %918 = vmatprep.subr.mxu0 0.0
        %919 = vmatpush1.msra.mxu0 0.0
        %920 = vmatprep.subr.mxu0 0.0
        %921 = vmatpush1.msra.mxu0 0.0
        %922 = vmatprep.subr.mxu0 0.0
        %923 = vmatpush1.msra.mxu0 0.0
        %924 = vmatprep.subr.mxu0 0.0
        %925 = vmatpush1.msra.mxu0 0.0
        %926 = vmatprep.subr.mxu0 0.0
        %927 = vmatpush1.msra.mxu0 0.0
        %928 = vmatprep.subr.mxu0 0.0
        %929 = vmatpush1.msra.mxu0 0.0
        %930 = vmatprep.subr.mxu0 0.0
        %931 = vmatpush1.msra.mxu0 0.0
        %932 = vmatprep.subr.mxu0 0.0
        %933 = vmatpush1.msra.mxu0 0.0
        %934 = vmatprep.subr.mxu0 0.0
        %935 = vmatpush1.msra.mxu0 0.0
        %936 = vmatprep.subr.mxu0 0.0
        %937 = vmatpush1.msra.mxu0 0.0
        %938 = vmatprep.subr.mxu0 0.0
        %939 = vmatpush1.msra.mxu0 0.0
        %940 = vmatprep.subr.mxu0 0.0
        %941 = vmatpush1.msra.mxu0 0.0
        %942 = vmatprep.subr.mxu0 0.0
        %943 = vmatpush1.msra.mxu0 0.0
        %944 = vmatprep.subr.mxu0 0.0
        %945 = vmatpush1.msra.mxu0 0.0
        %946 = vmatprep.subr.mxu0 0.0
        %947 = vmatpush1.msra.mxu0 0.0
        %948 = vmatprep.subr.mxu0 0.0
        %949 = vmatpush1.msra.mxu0 0.0
        %950 = vmatprep.subr.mxu0 0.0
        %951 = vmatpush1.msra.mxu0 0.0
        %952 = vmatprep.subr.mxu0 0.0
        %953 = vmatpush1.msra.mxu0 0.0
        %954 = vmatprep.subr.mxu0 0.0
        %955 = vmatpush1.msra.mxu0 0.0
        %956 = vmatprep.subr.mxu0 0.0
        %957 = vmatpush1.msra.mxu0 0.0
        %958 = vmatprep.subr.mxu0 0.0
        %959 = vmatpush1.msra.mxu0 0.0
        %960 = vmatprep.subr.mxu0 0.0
        %961 = vmatpush1.msra.mxu0 0.0
        %962 = vmatprep.subr.mxu0 0.0
        %963 = vmatpush1.msra.mxu0 0.0
        %964 = vmatprep.subr.mxu0 0.0
        %965 = vmatpush1.msra.mxu0 0.0
        %966 = vmatprep.subr.mxu0 0.0
        %967 = vmatpush1.msra.mxu0 0.0
        %968 = vmatprep.subr.mxu0 0.0
        %969 = vmatpush1.msra.mxu0 0.0
        %970 = vmatprep.subr.mxu0 0.0
        %971 = vmatpush1.msra.mxu0 0.0
        %972 = vmatprep.subr.mxu0 0.0
        %973 = vmatpush1.msra.mxu0 0.0
        %974 = vmatprep.subr.mxu0 0.0
        %975 = vmatpush1.msra.mxu0 0.0
        %976 = vmatprep.subr.mxu0 0.0
        %977 = vmatpush1.msra.mxu0 0.0
        %978 = vmatprep.mubr.f32.mxu0 0.0
        %979 = vmatmul.mubr.f32.gmra.mrb[0].mxu0 %v912
        %v980 = vpop.f32.mrb[0].mxu0
        %v981 = vadd.f32 0.0, %v980
        %v982 = vpop.f32.mrb[0].mxu0
        %983 = vdwg.mxu0
        %984 = vst.msk [vmem:[%s203] sm:$0xff] %vm221, %v753
        %985 = vst.msk [vmem:[%s203 + $0x8] sm:$0xff] %vm221, %v829
        %986 = vst.msk [vmem:[%s203 + $0x10] sm:$0xff] %vm221, %v905
        %987 = vst.msk [vmem:[%s203 + $0x18] sm:$0xff] %vm221, %v981
        %s988 = sand.u32 %s97, 1
        %s989 = scalar_lea.sflag [#allocation4], %s988
        %s990 = sand.u32 %s97, 1
        %s991 = smul.addr %s990, 32
        %s992 = scalar_lea.vmem [#allocation7], %s991
        // Predicated region
        $region41: #{tpu_custom_call.1} parent=31 // pred_check
          %p993 = pneg %p107
        $region42: #{tpu_custom_call.1} parent=31 // pred_check_branch
          %995 = sbr.rel (%p993) target = $region44
        $region43: #{tpu_custom_call.1} parent=31 // pred_region
          %s996 = smul.u32 4, %s21
          %s998 = ssub.s32 512, 512
          %999 = vsyncadd %s989, %s998
          %s1000 = smul.addr %s996, 128
          %s1001 = scalar_lea.hbm %s3, %s1000
          %s1002 = sshll.u32 %s992, 4
          %s1003 = int_to_ptr.vmem [resolvable:$true] %s1002
          %1008 = dma.vmem_to_hbm [thread:$0]  %s1003, 512, %s1001, %s989, 128, 128, 8
        $region44: #{tpu_custom_call.1} parent=31 // pred_fallthru
          _
      $region32: #{tpu_custom_call.1} parent=5 // pred_fallthru
        _
      %p1009 = scmp.le.s32.totalorder 2, %s16
      // Predicated region
      $region45: #{tpu_custom_call.1} parent=5 // pred_check
        %p1010 = pneg %p1009
      $region46: #{tpu_custom_call.1} parent=5 // pred_check_branch
        %1012 = sbr.rel (%p1010) target = $region48
      $region47: #{tpu_custom_call.1} parent=5 // pred_region
        %s1013 = ssub.s32 %s16, 2
        // Predicated region
        $region49: #{tpu_custom_call.1} parent=47 // pred_check
          %p1014 = pneg %p113
        $region50: #{tpu_custom_call.1} parent=47 // pred_check_branch
          %1016 = sbr.rel (%p1014) target = $region52
        $region51: #{tpu_custom_call.1} parent=47 // pred_region
          %s1017 = sand.u32 %s98, 1
          %s1018 = scalar_lea.sflag [#allocation4], %s1017
          %s1019 = sand.u32 %s98, 1
          %s1020 = smul.addr %s1019, 32
          %s1021 = scalar_lea.vmem [#allocation7], %s1020
          %1022 = dma.done %s1018, 512
        $region52: #{tpu_custom_call.1} parent=47 // pred_fallthru
          _
      $region48: #{tpu_custom_call.1} parent=5 // pred_fallthru
        _
    $region6: #{tpu_custom_call.1} parent=1 // loop_footer
      %s20 = sadd.s32 1, %s16
    $region7: #{tpu_custom_call.1} parent=1 // loop_footer_branch
      %15 = sbr.rel target = $region3
    $region8: #{tpu_custom_call.1} parent=1 // loop_exit
      _
    %1023 = vsyncpa [#allocation3], 1
    %s1024 = scalar_lea.sflag [#allocation3], 1
    %1025 = vsyncpa %s1024, 1
    %1026 = vsyncpa [#allocation6], 1
    %1027 = vsyncpa [#allocation4], 1
    %s1028 = scalar_lea.sflag [#allocation4], 1
    %1029 = vsyncpa %s1028, 1

</llo_original>
